<compile_context>
chip_gen: v6e
topology: v6e:2x2x1
jax: 0.10.0
libtpu: 0.0.40
codegen_flags: <defaults>
</compile_context>

<pallas_src>
import functools

import jax
import jax.numpy as jnp
from jax.experimental import pallas as pl
from jax.experimental.pallas import tpu as pltpu


# --------------------------------------------------------------------------- #
# helpers
# --------------------------------------------------------------------------- #
def _round_up(x, m):
    return (x + m - 1) // m * m


def _cdiv(a, b):
    return (a + b - 1) // b


@functools.lru_cache(maxsize=1)
def _vmem_capacity_bytes():
    """Per-TensorCore VMEM capacity (v5e/v6e: 128 MiB, v7x: 64 MiB)."""
    try:
        info = pltpu.get_tpu_info()
        cap = int(getattr(info, "vmem_capacity_bytes", 0) or 0)
        if cap > 0:
            return cap
    except Exception:
        pass
    try:
        kind = jax.devices()[0].device_kind.lower()
    except Exception:
        kind = ""
    if "7" in kind:            # v7x-style parts: 64 MiB per TensorCore
        return 64 << 20
    return 128 << 20           # v5e / v6e


def _pick_th(hid_p, max_th):
    """Largest multiple of 128 that divides hid_p and is <= max_th."""
    units = hid_p // 128
    best = 1
    for d in range(1, units + 1):
        if units % d == 0 and d * 128 <= max_th:
            best = d
    return best * 128


def _plan(m, d_in_p, hid_p, d_out_p, out_bytes, op_bytes,
          block_rows, block_hidden, allow_weight_resident):
    """Pick (tm, th) tile sizes given shapes and the chip's VMEM budget."""
    cap = _vmem_capacity_bytes()
    usable = int(cap * 0.85)          # leave headroom for compiler scratch

    # ---- row tile -----------------------------------------------------------
    tm = max(16, min(_round_up(block_rows, 16), _round_up(m, 16)))
    if m >= 256:
        # At least 2 row tiles so the 'parallel' axis can shard across the two
        # TensorCores of megacore parts (v7x, v4/v5p). Harmless elsewhere.
        tm = min(tm, _round_up(_cdiv(m, 2), 16))

    # ---- hidden-axis chunk --------------------------------------------------
    # Weight residency: if double-buffered W1+W2 fit in ~half the budget, keep
    # the full hidden axis in one chunk so weights are DMA'd exactly once.
    w_dbl = 2 * (d_in_p * hid_p + hid_p * d_out_p) * op_bytes
    if allow_weight_resident and w_dbl <= usable // 2:
        max_th = hid_p
    else:
        max_th = max(128, _round_up(block_hidden, 128))
    th = _pick_th(hid_p, max_th)      # always divides hid_p -> no dropped units

    def footprint(tm_, th_, n_h_):
        b = 2 * tm_ * d_in_p * op_bytes                      # x tile (2 bufs)
        b += 2 * tm_ * d_out_p * out_bytes                   # out tile (2 bufs)
        b += 2 * (d_in_p * th_ + th_ * d_out_p) * op_bytes   # W1/W2 chunks
        b += tm_ * th_ * 6                                   # f32 h + bf16 recast
        if n_h_ > 1:
            b += tm_ * d_out_p * 4                           # f32 accumulator
        return b

    # ---- shrink to fit the usable VMEM budget -------------------------------
    while True:
        n_h = hid_p // th
        if footprint(tm, th, n_h) <= usable:
            break
        if n_h == 1:
            # weights resident: keep residency, shrink the row tile first
            if tm > 128:
                tm = max(128, _round_up(tm // 2, 16))
            elif th > 128:
                th = _pick_th(hid_p, max(128, th // 2))
            elif tm > 16:
                tm = max(16, _round_up(tm // 2, 16))
            else:
                break
        else:
            # streaming weights: shrink hidden chunk first, keep tm large
            if th > 256:
                th = _pick_th(hid_p, max(256, th // 2))
            elif tm > 128:
                tm = max(128, _round_up(tm // 2, 16))
            elif th > 128:
                th = _pick_th(hid_p, 128)
            elif tm > 16:
                tm = max(16, _round_up(tm // 2, 16))
            else:
                break

    m_p = _round_up(m, tm)
    n_rows = m_p // tm
    n_h = hid_p // th
    fp = footprint(tm, th, n_h)
    vmem_limit = int(min(usable, max(2 * fp, 32 << 20)))
    return tm, th, m_p, n_rows, n_h, vmem_limit


# --------------------------------------------------------------------------- #
# kernels
# --------------------------------------------------------------------------- #
def _ffn_kernel_resident(x_ref, w1_ref, w2_ref, o_ref):
    """Whole hidden dim in one shot (W1/W2 VMEM-resident).  grid = (rows,)."""
    h = jnp.dot(x_ref[...], w1_ref[...], preferred_element_type=jnp.float32)
    h = jnp.maximum(h, 0.0).astype(w2_ref.dtype)   # ReLU; dropout(eval)=identity
    o_ref[...] = jnp.dot(h, w2_ref[...],
                         preferred_element_type=jnp.float32).astype(o_ref.dtype)


def _ffn_kernel_chunked_f32(x_ref, w1_ref, w2_ref, o_ref):
    """Hidden axis chunked; f32 output accumulated directly in o_ref."""
    k = pl.program_id(1)
    h = jnp.dot(x_ref[...], w1_ref[...], preferred_element_type=jnp.float32)
    h = jnp.maximum(h, 0.0).astype(w2_ref.dtype)
    y = jnp.dot(h, w2_ref[...], preferred_element_type=jnp.float32)

    @pl.when(k == 0)
    def _():
        o_ref[...] = y

    @pl.when(k > 0)
    def _():
        o_ref[...] += y


def _ffn_kernel_chunked(x_ref, w1_ref, w2_ref, o_ref, acc_ref):
    """Hidden axis chunked; f32 scratch accumulator (non-f32 outputs)."""
    k = pl.program_id(1)

    @pl.when(k == 0)
    def _():
        acc_ref[...] = jnp.zeros_like(acc_ref)

    h = jnp.dot(x_ref[...], w1_ref[...], preferred_element_type=jnp.float32)
    h = jnp.maximum(h, 0.0).astype(w2_ref.dtype)
    acc_ref[...] += jnp.dot(h, w2_ref[...], preferred_element_type=jnp.float32)

    @pl.when(k == pl.num_programs(1) - 1)
    def _():
        o_ref[...] = acc_ref[...].astype(o_ref.dtype)


# --------------------------------------------------------------------------- #
# wrapper
# --------------------------------------------------------------------------- #
def pack_ffn_weights(w1, w2, *, operand_dtype=jnp.bfloat16):
    """Transpose/pad/cast PyTorch-layout weights once (hoisted out of forward).

    w1: [H, D_in]   -> (D_in_p, H_p)    (lane-dense, 128-padded)
    w2: [D_out, H]  -> (H_p, D_out_p)
    Set operand_dtype=jnp.float32 for an accuracy-sensitive (slower) path.
    """
    hid, d_in = w1.shape
    d_out, hid2 = w2.shape
    assert hid2 == hid
    d_in_p = _round_up(d_in, 128)
    hid_p = _round_up(hid, 128)
    d_out_p = _round_up(d_out, 128)

    w1_t = w1.T.astype(operand_dtype)
    w2_t = w2.T.astype(operand_dtype)
    if (d_in_p, hid_p) != (d_in, hid):
        w1_t = jnp.pad(w1_t, ((0, d_in_p - d_in), (0, hid_p - hid)))
    if (hid_p, d_out_p) != (hid, d_out):
        w2_t = jnp.pad(w2_t, ((0, hid_p - hid), (0, d_out_p - d_out)))
    return w1_t, w2_t, d_out


@functools.partial(
    jax.jit,
    static_argnames=("d_out", "block_rows", "block_hidden",
                     "allow_weight_resident"))
def _ffn_apply_packed(x, w1_p, w2_p, *, d_out, block_rows=512,
                      block_hidden=512, allow_weight_resident=True):
    """out = relu(x @ W1^T) @ W2^T with pre-packed (padded, transposed) weights."""
    orig_shape = x.shape
    out_dtype = x.dtype
    d_in = orig_shape[-1]
    d_in_p, hid_p = w1_p.shape
    hid_p2, d_out_p = w2_p.shape
    assert hid_p2 == hid_p and d_in <= d_in_p and d_out <= d_out_p

    x2d = x.reshape(-1, d_in)
    m = x2d.shape[0]

    out_bytes = jnp.dtype(out_dtype).itemsize
    op_bytes = jnp.dtype(w1_p.dtype).itemsize

    tm, th, m_p, n_rows, n_h, vmem_limit = _plan(
        m, d_in_p, hid_p, d_out_p, out_bytes, op_bytes,
        block_rows, block_hidden, allow_weight_resident)

    # Cast operands; pad activations only if actually needed (zero padding is
    # exact: padded rows/cols contribute nothing and relu(0) = 0).
    x2d = x2d.astype(w1_p.dtype)
    if m_p != m or d_in_p != d_in:
        x2d = jnp.pad(x2d, ((0, m_p - m), (0, d_in_p - d_in)))

    weight_bytes = (d_in_p * hid_p + hid_p * d_out_p) * op_bytes
    weight_passes = 1 if n_h == 1 else n_rows   # resident -> fetched once
    cost = pl.CostEstimate(
        flops=2 * m_p * (d_in_p * hid_p + hid_p * d_out_p),
        transcendentals=0,
        bytes_accessed=(m_p * d_in_p * op_bytes
                        + weight_passes * weight_bytes
                        + m_p * d_out_p * out_bytes),
    )

    if n_h == 1:
        # Weights fully VMEM-resident: constant index_maps -> DMA'd once.
        grid = (n_rows,)
        in_specs = [
            pl.BlockSpec((tm, d_in_p), lambda i: (i, 0)),
            pl.BlockSpec((d_in_p, hid_p), lambda i: (0, 0)),
            pl.BlockSpec((hid_p, d_out_p), lambda i: (0, 0)),
        ]
        out_specs = pl.BlockSpec((tm, d_out_p), lambda i: (i, 0))
        kernel = _ffn_kernel_resident
        scratch = []
        semantics = ("parallel",)
    else:
        grid = (n_rows, n_h)
        in_specs = [
            pl.BlockSpec((tm, d_in_p), lambda i, k: (i, 0)),
            pl.BlockSpec((d_in_p, th), lambda i, k: (0, k)),
            pl.BlockSpec((th, d_out_p), lambda i, k: (k, 0)),
        ]
        out_specs = pl.BlockSpec((tm, d_out_p), lambda i, k: (i, 0))
        semantics = ("parallel", "arbitrary")
        if out_dtype == jnp.float32:
            kernel = _ffn_kernel_chunked_f32   # accumulate straight into o_ref
            scratch = []
        else:
            kernel = _ffn_kernel_chunked
            scratch = [pltpu.VMEM((tm, d_out_p), jnp.float32)]

    out_p = pl.pallas_call(
        kernel,
        out_shape=jax.ShapeDtypeStruct((m_p, d_out_p), out_dtype),
        grid_spec=pltpu.PrefetchScalarGridSpec(
            num_scalar_prefetch=0,
            grid=grid,
            in_specs=in_specs,
            out_specs=out_specs,
            scratch_shapes=scratch,
        ),
        compiler_params=pltpu.CompilerParams(
            dimension_semantics=semantics,
            vmem_limit_bytes=vmem_limit,
        ),
        cost_estimate=cost,
    )(x2d, w1_p, w2_p)

    out = out_p
    if m_p != m or d_out_p != d_out:
        out = out[:m, :d_out]
    return out.reshape(*orig_shape[:-1], d_out)


class PallasFFN:
    """FFNLayer with weights packed once at construction (per-call path is
    just the fused Pallas kernel)."""

    def __init__(self, w1, w2, *, block_rows=512, block_hidden=512,
                 operand_dtype=jnp.bfloat16):
        self._w1_p, self._w2_p, self._d_out = pack_ffn_weights(
            w1, w2, operand_dtype=operand_dtype)
        self._block_rows = block_rows
        self._block_hidden = block_hidden

    def __call__(self, x, *, allow_weight_resident=True):
        return _ffn_apply_packed(
            x, self._w1_p, self._w2_p, d_out=self._d_out,
            block_rows=self._block_rows, block_hidden=self._block_hidden,
            allow_weight_resident=allow_weight_resident)


def ffn_forward(x, w1, w2, **kwargs):
    """Convenience one-shot API (packs weights per call; prefer PallasFFN)."""
    w1_p, w2_p, d_out = pack_ffn_weights(w1, w2)
    return _ffn_apply_packed(x, w1_p, w2_p, d_out=d_out, **kwargs)


def ffn_reference(x, w1, w2):
    return jnp.maximum(x @ w1.T, 0.0) @ w2.T


# --------------------------------------------------------------------------- #
# self-test
# --------------------------------------------------------------------------- #
if __name__ == "__main__":
    # Shapes consistent with TransformerDecoder's FFNLayer(hidden, hidden*4, hidden).
    batch, seq = 2, 8
    hidden = 32
    input_size, hidden_size, output_size = hidden, hidden * 4, hidden

    key = jax.random.PRNGKey(0)
    kx, k1, k2, k3, k4 = jax.random.split(key, 5)

    # Inputs: [batch, seq, input_size]
    x = jax.random.normal(kx, (batch, seq, input_size), dtype=jnp.float32)

    # nn.Linear weights in PyTorch layout [out_features, in_features].
    w1 = jax.random.normal(k1, (hidden_size, input_size), dtype=jnp.float32) * 0.05
    w2 = jax.random.normal(k2, (output_size, hidden_size), dtype=jnp.float32) * 0.05

    # 1) Main path: weights packed once, VMEM-resident, single fused step.
    ffn = PallasFFN(w1, w2)
    out = jax.block_until_ready(ffn(x))
    ref = ffn_reference(x, w1, w2)
    assert out.shape == (batch, seq, output_size)
    assert jnp.allclose(out, ref, atol=2e-2, rtol=2e-2), "resident path mismatch"

    # 2) Hidden-chunked (streamed-weight) path, f32 output (direct o_ref accum).
    hs2 = 256
    w1b = jax.random.normal(k3, (hs2, input_size), dtype=jnp.float32) * 0.05
    w2b = jax.random.normal(k4, (output_size, hs2), dtype=jnp.float32) * 0.05
    ffn_b = PallasFFN(w1b, w2b, block_hidden=128)
    out_b = jax.block_until_ready(ffn_b(x, allow_weight_resident=False))
    ref_b = ffn_reference(x, w1b, w2b)
    assert jnp.allclose(out_b, ref_b, atol=2e-2, rtol=2e-2), "chunked f32 mismatch"

    # 3) Hidden-chunked path with bf16 activations (f32 scratch accumulator).
    xb = x.astype(jnp.bfloat16)
    out_c = jax.block_until_ready(ffn_b(xb, allow_weight_resident=False))
    ref_c = ffn_reference(xb.astype(jnp.float32), w1b, w2b)
    assert jnp.allclose(out_c.astype(jnp.float32), ref_c,
                        atol=8e-2, rtol=8e-2), "chunked bf16 mismatch"

    print("KERNEL_OK")
</pallas_src>

<mosaic_0001>
module attributes {stable_mosaic.version = 11 : i64} {
  func.func @_ffn_kernel_resident(%arg0: i32, %arg1: memref<16x128xbf16, #tpu.memory_space<vmem>>, %arg2: memref<128x128xbf16, #tpu.memory_space<vmem>>, %arg3: memref<128x128xbf16, #tpu.memory_space<vmem>>, %arg4: memref<16x128xf32, #tpu.memory_space<vmem>>) attributes {dimension_semantics = [#tpu.dimension_semantics<parallel>], iteration_bounds = array<i64: 1>, scalar_prefetch = 0 : i64, scratch_operands = 0 : i64, tpu.core_type = #tpu.core_type<tc>, window_params = [{transform_indices = @transform_0, window_bounds = array<i64: 16, 128>}, {pipeline_mode = #tpu.pipeline_mode<synchronous>, transform_indices = @transform_1, window_bounds = array<i64: 128, 128>}, {pipeline_mode = #tpu.pipeline_mode<synchronous>, transform_indices = @transform_2, window_bounds = array<i64: 128, 128>}, {transform_indices = @transform_3, window_bounds = array<i64: 16, 128>}]} {
    %c0 = arith.constant 0 : index
    %c0_0 = arith.constant 0 : index
    %0 = vector.load %arg1[%c0, %c0_0] : memref<16x128xbf16, #tpu.memory_space<vmem>>, vector<16x128xbf16>
    %c0_1 = arith.constant 0 : index
    %c0_2 = arith.constant 0 : index
    %1 = vector.load %arg2[%c0_1, %c0_2] : memref<128x128xbf16, #tpu.memory_space<vmem>>, vector<128x128xbf16>
    %cst = arith.constant dense<0.000000e+00> : vector<16x128xf32>
    %2 = tpu.matmul %0, %1, %cst {dimension_numbers = #tpu.dot_dimension_numbers<[1], [0], [0], [1], [0, 0, 1, 1], [], []>} : vector<16x128xbf16>, vector<128x128xbf16>, vector<16x128xf32> -> vector<16x128xf32>
    %cst_3 = arith.constant 0.000000e+00 : f32
    %3 = vector.broadcast %cst_3 : f32 to vector<16x128xf32>
    %4 = arith.maximumf %2, %3 : vector<16x128xf32>
    %5 = arith.truncf %4 : vector<16x128xf32> to vector<16x128xbf16>
    %c0_4 = arith.constant 0 : index
    %c0_5 = arith.constant 0 : index
    %6 = vector.load %arg3[%c0_4, %c0_5] : memref<128x128xbf16, #tpu.memory_space<vmem>>, vector<128x128xbf16>
    %cst_6 = arith.constant dense<0.000000e+00> : vector<16x128xf32>
    %7 = tpu.matmul %5, %6, %cst_6 {dimension_numbers = #tpu.dot_dimension_numbers<[1], [0], [0], [1], [0, 0, 1, 1], [], []>} : vector<16x128xbf16>, vector<128x128xbf16>, vector<16x128xf32> -> vector<16x128xf32>
    %c0_7 = arith.constant 0 : index
    %c0_8 = arith.constant 0 : index
    %8 = vector.load %arg4[%c0_7, %c0_8] : memref<16x128xf32, #tpu.memory_space<vmem>>, vector<16x128xf32>
    tpu.vector_store %arg4[%c0_7, %c0_8], %7 {strides = array<i32>} : memref<16x128xf32, #tpu.memory_space<vmem>>, vector<16x128xf32>,
    return
  }
  func.func @transform_0(%arg0: i32) -> (i32, i32) {
    %c0_i32 = arith.constant 0 : i32
    %c0_i32_0 = arith.constant 0 : i32
    return %arg0, %c0_i32 : i32, i32
  }
  func.func @transform_1(%arg0: i32) -> (i32, i32) {
    %c0_i32 = arith.constant 0 : i32
    %c0_i32_0 = arith.constant 0 : i32
    %c0_i32_1 = arith.constant 0 : i32
    return %c0_i32, %c0_i32_0 : i32, i32
  }
  func.func @transform_2(%arg0: i32) -> (i32, i32) {
    %c0_i32 = arith.constant 0 : i32
    %c0_i32_0 = arith.constant 0 : i32
    %c0_i32_1 = arith.constant 0 : i32
    return %c0_i32, %c0_i32_0 : i32, i32
  }
  func.func @transform_3(%arg0: i32) -> (i32, i32) {
    %c0_i32 = arith.constant 0 : i32
    %c0_i32_0 = arith.constant 0 : i32
    return %arg0, %c0_i32 : i32, i32
  }
}

</mosaic_0001>

<llo_original>
// kernel: _ffn_apply_packed.1
$region0: #{_ffn_apply_packed.1}
  #allocation0 [shape = 'u32[]', space=smem, size = 0x4, offset = 0x4, fixed_abs, tag = 'smem constant byte address 0x4 - core index']
  #allocation1 [shape = 'u32[144,128]{1,0:T(1,128)}', space=vmem, size = 0x12000, scoped, tag = 'internal scratch']
  %s0 = inlined_call_operand.vmem [shape: bf16[16,128], index: 0, kind: input, shape index: {}]
  %s1 = inlined_call_operand.hbm [shape: bf16[128,128], index: 1, kind: input, shape index: {}]
  %s2 = inlined_call_operand.hbm [shape: bf16[128,128], index: 2, kind: input, shape index: {}]
  %s3 = inlined_call_operand.vmem [shape: f32[16,128], index: 3, kind: output, shape index: {}]
  %s4 = sld [smem:[#allocation0]]
  $region30: #{_ffn_apply_packed.1} parent=0
    _
  %s6 = ssub.s32 1, %s4
  %s7 = scalar_select 0, %s6, %s4
  $region1: #{_ffn_apply_packed.1} parent=0
    #allocation2 [shape = 'u8[32768]{0}', space=vmem, size = 0x8000, scoped, tag = 'input window, operand 1, single buffered']
    #allocation3 [shape = 's32[1]{0}', space=sflag, size = 0x4, scoped, tag = 'scoped memory for _ffn_apply_packed.1']
    #allocation4 [shape = 'u8[32768]{0}', space=vmem, size = 0x8000, scoped, tag = 'input window, operand 2, single buffered']
    #allocation5 [shape = 's32[1]{0}', space=sflag, size = 0x4, scoped, tag = 'scoped memory for _ffn_apply_packed.1']
    %8 = vsyncpa [#allocation3], 0
    %9 = vsyncpa [#allocation5], 0
    // Predicated region
    $region2: #{_ffn_apply_packed.1} parent=1 // pred_check
      _
    $region3: #{_ffn_apply_packed.1} parent=1 // pred_check_branch
      %11 = sbr.rel (0) target = $region5
    $region4: #{_ffn_apply_packed.1} parent=1 // pred_region
      _
    $region5: #{_ffn_apply_packed.1} parent=1 // pred_fallthru
      _
    // Predicated region
    $region6: #{_ffn_apply_packed.1} parent=1 // pred_check
      _
    $region7: #{_ffn_apply_packed.1} parent=1 // pred_check_branch
      %13 = sbr.rel (0) target = $region9
    $region8: #{_ffn_apply_packed.1} parent=1 // pred_region
      %s15 = ssub.s32 1024, 1024
      %16 = vsyncadd [#allocation3], %s15
      %s17 = sshll.u32 [#allocation2], 4
      %s18 = int_to_ptr.vmem [resolvable:$true] %s17
      %23 = dma.hbm_to_vmem [thread:$0]  %s1, 1024, %s18, [#allocation3], 64, 64, 4
    $region9: #{_ffn_apply_packed.1} parent=1 // pred_fallthru
      _
    // Predicated region
    $region10: #{_ffn_apply_packed.1} parent=1 // pred_check
      _
    $region11: #{_ffn_apply_packed.1} parent=1 // pred_check_branch
      %25 = sbr.rel (0) target = $region13
    $region12: #{_ffn_apply_packed.1} parent=1 // pred_region
      %s27 = ssub.s32 1024, 1024
      %28 = vsyncadd [#allocation5], %s27
      %s29 = sshll.u32 [#allocation4], 4
      %s30 = int_to_ptr.vmem [resolvable:$true] %s29
      %35 = dma.hbm_to_vmem [thread:$0]  %s2, 1024, %s30, [#allocation5], 64, 64, 4
    $region13: #{_ffn_apply_packed.1} parent=1 // pred_fallthru
      _
    // Predicated region
    $region14: #{_ffn_apply_packed.1} parent=1 // pred_check
      _
    $region15: #{_ffn_apply_packed.1} parent=1 // pred_check_branch
      %37 = sbr.rel (0) target = $region17
    $region16: #{_ffn_apply_packed.1} parent=1 // pred_region
      %38 = dma.done [#allocation3], 1024
    $region17: #{_ffn_apply_packed.1} parent=1 // pred_fallthru
      _
    // Predicated region
    $region18: #{_ffn_apply_packed.1} parent=1 // pred_check
      _
    $region19: #{_ffn_apply_packed.1} parent=1 // pred_check_branch
      %40 = sbr.rel (0) target = $region21
    $region20: #{_ffn_apply_packed.1} parent=1 // pred_region
      %41 = dma.done [#allocation5], 1024
    $region21: #{_ffn_apply_packed.1} parent=1 // pred_fallthru
      _
    %v43 = vld [vmem:[%s0] sm:$0xf]
    %v44 = vld [vmem:[%s0 + $0x4] sm:$0xf]
    %v45 = vld [vmem:[#allocation2] sm:$0xf]
    %v46 = vld [vmem:[#allocation2 + $0x4] sm:$0xf]
    %v47 = vld [vmem:[#allocation2 + $0x8] sm:$0xf]
    %v48 = vld [vmem:[#allocation2 + $0xc] sm:$0xf]
    %v49 = vld [vmem:[#allocation2 + $0x10] sm:$0xf]
    %v50 = vld [vmem:[#allocation2 + $0x14] sm:$0xf]
    %v51 = vld [vmem:[#allocation2 + $0x18] sm:$0xf]
    %v52 = vld [vmem:[#allocation2 + $0x1c] sm:$0xf]
    %v53 = vld [vmem:[#allocation2 + $0x20] sm:$0xf]
    %v54 = vld [vmem:[#allocation2 + $0x24] sm:$0xf]
    %v55 = vld [vmem:[#allocation2 + $0x28] sm:$0xf]
    %v56 = vld [vmem:[#allocation2 + $0x2c] sm:$0xf]
    %v57 = vld [vmem:[#allocation2 + $0x30] sm:$0xf]
    %v58 = vld [vmem:[#allocation2 + $0x34] sm:$0xf]
    %v59 = vld [vmem:[#allocation2 + $0x38] sm:$0xf]
    %v60 = vld [vmem:[#allocation2 + $0x3c] sm:$0xf]
    %v63 = vunpack.c.l.b16 %v43
    %v64 = vunpack.c.l.b16 %v44
    %v65 = vpack.c.b16 %v64, %v63
    %v83 = vunpack.c.l.b16 %v45
    %v84 = vunpack.c.l.b16 %v46
    %v85 = vunpack.c.l.b16 %v47
    %v86 = vunpack.c.l.b16 %v48
    %v87 = vunpack.c.l.b16 %v49
    %v88 = vunpack.c.l.b16 %v50
    %v89 = vunpack.c.l.b16 %v51
    %v90 = vunpack.c.l.b16 %v52
    %v91 = vunpack.c.l.b16 %v53
    %v92 = vunpack.c.l.b16 %v54
    %v93 = vunpack.c.l.b16 %v55
    %v94 = vunpack.c.l.b16 %v56
    %v95 = vunpack.c.l.b16 %v57
    %v96 = vunpack.c.l.b16 %v58
    %v97 = vunpack.c.l.b16 %v59
    %v98 = vunpack.c.l.b16 %v60
    %v99 = vpack.c.b16 %v84, %v83
    %v100 = vpack.c.b16 %v86, %v85
    %v101 = vpack.c.b16 %v88, %v87
    %v102 = vpack.c.b16 %v90, %v89
    %v103 = vpack.c.b16 %v92, %v91
    %v104 = vpack.c.b16 %v94, %v93
    %v105 = vpack.c.b16 %v96, %v95
    %v106 = vpack.c.b16 %v98, %v97
    %115 = vmatprep.subr.bf16.mxu0 0
    %116 = vmatpush1.bf16.msra.mxu0 %v106
    %117 = vmatprep.subr.bf16.mxu0 0
    %118 = vmatpush1.bf16.msra.mxu0 %v105
    %119 = vmatprep.subr.bf16.mxu0 0
    %120 = vmatpush1.bf16.msra.mxu0 %v104
    %121 = vmatprep.subr.bf16.mxu0 0
    %122 = vmatpush1.bf16.msra.mxu0 %v103
    %123 = vmatprep.subr.bf16.mxu0 0
    %124 = vmatpush1.bf16.msra.mxu0 %v102
    %125 = vmatprep.subr.bf16.mxu0 0
    %126 = vmatpush1.bf16.msra.mxu0 %v101
    %127 = vmatprep.subr.bf16.mxu0 0
    %128 = vmatpush1.bf16.msra.mxu0 %v100
    %129 = vmatprep.subr.bf16.mxu0 0
    %130 = vmatpush1.bf16.msra.mxu0 %v99
    %131 = vmatprep.subr.bf16.mxu0 0
    %132 = vmatpush2.bf16.msra.mxu0 0
    %133 = vmatprep.subr.bf16.mxu0 0
    %134 = vmatpush2.bf16.msra.mxu0 0
    %135 = vmatprep.subr.bf16.mxu0 0
    %136 = vmatpush2.bf16.msra.mxu0 0
    %137 = vmatprep.subr.bf16.mxu0 0
    %138 = vmatpush2.bf16.msra.mxu0 0
    %139 = vmatprep.subr.bf16.mxu0 0
    %140 = vmatpush2.bf16.msra.mxu0 0
    %141 = vmatprep.subr.bf16.mxu0 0
    %142 = vmatpush2.bf16.msra.mxu0 0
    %143 = vmatprep.subr.bf16.mxu0 0
    %144 = vmatpush2.bf16.msra.mxu0 0
    %145 = vmatprep.subr.bf16.mxu0 0
    %146 = vmatpush2.bf16.msra.mxu0 0
    %147 = vmatprep.mubr.bf16.mxu0 0
    %148 = vmatmul.mubr.bf16.gmra.mxu0 %v65
    %v149 = vpop.f32.mrf.mxu0
    %v150 = vadd.f32 0.0, %v149
    %v151 = vpop.f32.mrf.mxu0
    %v152 = vpop.f32.mrf.mxu0
    %v153 = vadd.f32 0.0, %v152
    %v154 = vpop.f32.mrf.mxu0
    %155 = vdwg.mxu0
    %v156 = vmax.f32 %v150, 0.0
    %v157 = vmax.f32 %v153, 0.0
    %v158 = vpack.c.bf16 %v157, %v156
    %v159 = vld [vmem:[#allocation4] sm:$0xf]
    %v160 = vld [vmem:[#allocation4 + $0x4] sm:$0xf]
    %v161 = vld [vmem:[#allocation4 + $0x8] sm:$0xf]
    %v162 = vld [vmem:[#allocation4 + $0xc] sm:$0xf]
    %v163 = vld [vmem:[#allocation4 + $0x10] sm:$0xf]
    %v164 = vld [vmem:[#allocation4 + $0x14] sm:$0xf]
    %v165 = vld [vmem:[#allocation4 + $0x18] sm:$0xf]
    %v166 = vld [vmem:[#allocation4 + $0x1c] sm:$0xf]
    %v167 = vld [vmem:[#allocation4 + $0x20] sm:$0xf]
    %v168 = vld [vmem:[#allocation4 + $0x24] sm:$0xf]
    %v169 = vld [vmem:[#allocation4 + $0x28] sm:$0xf]
    %v170 = vld [vmem:[#allocation4 + $0x2c] sm:$0xf]
    %v171 = vld [vmem:[#allocation4 + $0x30] sm:$0xf]
    %v172 = vld [vmem:[#allocation4 + $0x34] sm:$0xf]
    %v173 = vld [vmem:[#allocation4 + $0x38] sm:$0xf]
    %v174 = vld [vmem:[#allocation4 + $0x3c] sm:$0xf]
    %v191 = vunpack.c.l.b16 %v159
    %v192 = vunpack.c.l.b16 %v160
    %v193 = vunpack.c.l.b16 %v161
    %v194 = vunpack.c.l.b16 %v162
    %v195 = vunpack.c.l.b16 %v163
    %v196 = vunpack.c.l.b16 %v164
    %v197 = vunpack.c.l.b16 %v165
    %v198 = vunpack.c.l.b16 %v166
    %v199 = vunpack.c.l.b16 %v167
    %v200 = vunpack.c.l.b16 %v168
    %v201 = vunpack.c.l.b16 %v169
    %v202 = vunpack.c.l.b16 %v170
    %v203 = vunpack.c.l.b16 %v171
    %v204 = vunpack.c.l.b16 %v172
    %v205 = vunpack.c.l.b16 %v173
    %v206 = vunpack.c.l.b16 %v174
    %v207 = vpack.c.b16 %v192, %v191
    %v208 = vpack.c.b16 %v194, %v193
    %v209 = vpack.c.b16 %v196, %v195
    %v210 = vpack.c.b16 %v198, %v197
    %v211 = vpack.c.b16 %v200, %v199
    %v212 = vpack.c.b16 %v202, %v201
    %v213 = vpack.c.b16 %v204, %v203
    %v214 = vpack.c.b16 %v206, %v205
    %223 = vmatprep.subr.bf16.mxu0 0
    %224 = vmatpush1.bf16.msra.mxu0 %v214
    %225 = vmatprep.subr.bf16.mxu0 0
    %226 = vmatpush1.bf16.msra.mxu0 %v213
    %227 = vmatprep.subr.bf16.mxu0 0
    %228 = vmatpush1.bf16.msra.mxu0 %v212
    %229 = vmatprep.subr.bf16.mxu0 0
    %230 = vmatpush1.bf16.msra.mxu0 %v211
    %231 = vmatprep.subr.bf16.mxu0 0
    %232 = vmatpush1.bf16.msra.mxu0 %v210
    %233 = vmatprep.subr.bf16.mxu0 0
    %234 = vmatpush1.bf16.msra.mxu0 %v209
    %235 = vmatprep.subr.bf16.mxu0 0
    %236 = vmatpush1.bf16.msra.mxu0 %v208
    %237 = vmatprep.subr.bf16.mxu0 0
    %238 = vmatpush1.bf16.msra.mxu0 %v207
    %239 = vmatprep.subr.bf16.mxu0 0
    %240 = vmatpush2.bf16.msra.mxu0 0
    %241 = vmatprep.subr.bf16.mxu0 0
    %242 = vmatpush2.bf16.msra.mxu0 0
    %243 = vmatprep.subr.bf16.mxu0 0
    %244 = vmatpush2.bf16.msra.mxu0 0
    %245 = vmatprep.subr.bf16.mxu0 0
    %246 = vmatpush2.bf16.msra.mxu0 0
    %247 = vmatprep.subr.bf16.mxu0 0
    %248 = vmatpush2.bf16.msra.mxu0 0
    %249 = vmatprep.subr.bf16.mxu0 0
    %250 = vmatpush2.bf16.msra.mxu0 0
    %251 = vmatprep.subr.bf16.mxu0 0
    %252 = vmatpush2.bf16.msra.mxu0 0
    %253 = vmatprep.subr.bf16.mxu0 0
    %254 = vmatpush2.bf16.msra.mxu0 0
    %255 = vmatprep.mubr.bf16.mxu0 0
    %256 = vmatmul.mubr.bf16.gmra.mxu0 %v158
    %v257 = vpop.f32.mrf.mxu0
    %v258 = vadd.f32 0.0, %v257
    %v259 = vpop.f32.mrf.mxu0
    %v260 = vpop.f32.mrf.mxu0
    %v261 = vadd.f32 0.0, %v260
    %v262 = vpop.f32.mrf.mxu0
    %263 = vdwg.mxu0
    %264 = vst [vmem:[%s3] sm:$0xff] %v258
    %265 = vst [vmem:[%s3 + $0x8] sm:$0xff] %v261
    // Predicated region
    $region22: #{_ffn_apply_packed.1} parent=1 // pred_check
      _
    $region23: #{_ffn_apply_packed.1} parent=1 // pred_check_branch
      %267 = sbr.rel (0) target = $region25
    $region24: #{_ffn_apply_packed.1} parent=1 // pred_region
      _
    $region25: #{_ffn_apply_packed.1} parent=1 // pred_fallthru
      _
    // Predicated region
    $region26: #{_ffn_apply_packed.1} parent=1 // pred_check
      _
    $region27: #{_ffn_apply_packed.1} parent=1 // pred_check_branch
      %269 = sbr.rel (0) target = $region29
    $region28: #{_ffn_apply_packed.1} parent=1 // pred_region
      _
    $region29: #{_ffn_apply_packed.1} parent=1 // pred_fallthru
      _
    %270 = vsyncpa [#allocation3], 1
    %271 = vsyncpa [#allocation5], 1

</llo_original>
